<compile_context>
chip_gen: v6e
topology: v6e:2x2x1
jax: 0.10.0
libtpu: 0.0.40
codegen_flags: <defaults>
</compile_context>

<pallas_src>
import functools

import jax
import jax.numpy as jnp
from jax.experimental import pallas as pl
from jax.experimental.pallas import tpu as pltpu


EPS = 1e-6


def _off_kernel(x_ref, w1_ref, b1_ref, r_ref, consts_ref, o_ref, *, approx_recip):
    w1 = w1_ref[...]                       # (HW, D0), bf16 or f32 (host decides)
    x = x_ref[...].astype(w1.dtype)        # in-kernel cast only for the pipelined tile

    # ---- Linear 1 on the MXU: (TB, HW) @ (HW, D0), f32 accumulate ----
    h = jnp.dot(x, w1, preferred_element_type=jnp.float32)
    # bias + ReLU fused right after the matmul (no intermediate passes over h).
    h = jnp.maximum(h + b1_ref[...], 0.0)

    d0 = h.shape[-1]

    # ---- Linear lane reductions offloaded to the idle MXU ----
    # R = [ones | alpha*w2 | 0 ...] so one matmul yields both sum(h) and
    # sum(h * alpha*w2) (the folded Norm-scale + Linear-2 weight).
    rmat = r_ref[...]                      # (D0, 128), same dtype as w1
    red = jnp.dot(h.astype(rmat.dtype), rmat, preferred_element_type=jnp.float32)
    s = red[:, 0:1]                        # (TB, 1)  sum(h)
    hw2 = red[:, 1:2]                      # (TB, 1)  sum(h * alpha*w2)

    # sum(h*h) stays on the VPU in f32 (one-pass variance).
    s2 = jnp.sum(h * h, axis=-1, keepdims=True)

    mean = s * (1.0 / d0)
    # torch.std is unbiased (divide by N-1); clamp tiny fp-rounding negatives.
    var = jnp.maximum((s2 - s * mean) * (1.0 / (d0 - 1)), 0.0)
    std = jnp.sqrt(var)
    denom = std + EPS
    inv = pl.reciprocal(denom, approx=True) if approx_recip else 1.0 / denom

    c0 = consts_ref[0]      # beta @ w2 + b2
    w2sum = consts_ref[1]   # sum(alpha * w2)

    # out = ((h - mean) * alpha / (std+eps) + beta) @ w2 + b2, fully folded.
    out = (hw2 - mean * w2sum) * inv + c0
    o_ref[...] = out.astype(o_ref.dtype)


def _round_up(n, m):
    return ((n + m - 1) // m) * m


def _default_use_bf16():
    # v5e: K (= H*W) is tiny so the MXU is nowhere near the bottleneck and the
    # VPU has no bf16 support -> keep f32 (free precision).  Other gens: bf16.
    try:
        kind = jax.devices()[0].device_kind.lower()
    except Exception:
        return True
    return not ("v5 lite" in kind or "v5e" in kind or "v5litepod" in kind)


def output_feed_forward(x, w1_t, b1, alpha, beta, w2_t, b2, *,
                        block_b=None, use_bf16_mxu=None,
                        approx_reciprocal=True, vmem_limit_bytes=None):
    """Fused OutputFeedForward forward (eval mode).

    x: (B, H*W) f32; w1_t: (H*W, D0); b1/alpha/beta: (1, D0); w2_t: (D0, 1); b2: (1, 1).
    Weights are passed pre-transposed (in_features, out_features).
    """
    B, HW = x.shape
    D0 = w1_t.shape[1]

    if use_bf16_mxu is None:
        use_bf16_mxu = _default_use_bf16()
    param_dtype = jnp.bfloat16 if use_bf16_mxu else jnp.float32

    # ---- host-side folds (O(D0) work, done once) ----
    w2_row = w2_t.reshape(D0).astype(jnp.float32)
    alpha_row = alpha.reshape(D0).astype(jnp.float32)
    w2_eff = alpha_row * w2_row                                   # Norm scale folded into Linear 2
    r_mat = jnp.zeros((D0, 128), jnp.float32)
    r_mat = r_mat.at[:, 0].set(1.0).at[:, 1].set(w2_eff)
    r_mat = r_mat.astype(param_dtype)                             # MXU reduction matrix
    w2sum = jnp.sum(r_mat[:, 1].astype(jnp.float32))              # matches weights actually used
    c0 = jnp.sum(beta.reshape(-1) * w2_row) + b2.reshape(())      # beta @ w2 + b2
    consts = jnp.stack([c0.astype(jnp.float32), w2sum]).astype(jnp.float32)

    w1_dev = w1_t.astype(param_dtype)                             # one-time cast, VMEM-resident
    b1_dev = b1.reshape(1, D0).astype(jnp.float32)                # added post-accumulate in f32

    # ---- batch tiling: big tiles amortize step overhead; >= 2 tiles for v7x ----
    if block_b is None:
        block_b = min(2048, _round_up(pl.cdiv(B, 2), 8)) if B > 8 else 8
    block_b = max(8, (block_b // 8) * 8)
    block_b = min(block_b, _round_up(B, 8))
    grid = (pl.cdiv(B, block_b),)     # ragged tail handled by Pallas; no host-side pad copy

    if vmem_limit_bytes is None:
        pb = 2 if use_bf16_mxu else 4
        est = (2 * (block_b * HW * 4 + HW * D0 * pb + D0 * 4
                    + D0 * 128 * pb + block_b * 4)
               + block_b * D0 * 4 + block_b * 128 * 4 + block_b * HW * pb)
        vmem_limit_bytes = max(int(est * 1.5), 8 * 1024 * 1024)

    kernel = functools.partial(_off_kernel, approx_recip=approx_reciprocal)
    out = pl.pallas_call(
        kernel,
        out_shape=jax.ShapeDtypeStruct((B, 1), jnp.float32),
        grid=grid,
        in_specs=[
            pl.BlockSpec((block_b, HW), lambda i: (i, 0)),        # x: batch-tiled, pipelined
            pl.BlockSpec((HW, D0), lambda i: (0, 0)),             # W1^T: resident
            pl.BlockSpec((1, D0), lambda i: (0, 0)),              # b1: resident
            pl.BlockSpec((D0, 128), lambda i: (0, 0)),            # R = [1 | alpha*w2 | 0]: resident
            pl.BlockSpec(memory_space=pltpu.MemorySpace.SMEM),    # folded scalars
        ],
        out_specs=pl.BlockSpec((block_b, 1), lambda i: (i, 0)),
        compiler_params=pltpu.CompilerParams(
            dimension_semantics=("parallel",),
            vmem_limit_bytes=int(vmem_limit_bytes),
        ),
    )(x, w1_dev, b1_dev, r_mat, consts)
    return out


def reference(x, w1_t, b1, alpha, beta, w2_t, b2):
    h = x @ w1_t + b1
    h = jnp.maximum(h, 0.0)
    d0 = h.shape[-1]
    mean = jnp.mean(h, axis=-1, keepdims=True)
    c = h - mean
    std = jnp.sqrt(jnp.sum(c * c, axis=-1, keepdims=True) / (d0 - 1))
    n = alpha * c / (std + EPS) + beta
    return n @ w2_t + b2


if __name__ == "__main__":
    # Small shapes consistent with OutputFeedForward(H, W, d_layers=[D0, 1]).
    H, W = 4, 8           # H*W = 32 input features
    D0 = 128              # first hidden layer (module default would be 512)
    B = 20                # batch; not a tile multiple -> exercises the ragged tail

    key = jax.random.PRNGKey(0)
    k_x, k_w1, k_b1, k_a, k_be, k_w2, k_b2 = jax.random.split(key, 7)

    x = jax.random.normal(k_x, (B, H * W), dtype=jnp.float32)

    # Deterministic synthetic parameters (PyTorch-like shapes, pre-transposed).
    w1_t = jax.random.normal(k_w1, (H * W, D0), dtype=jnp.float32) * 0.05   # Linear(H*W, D0).weight^T
    b1 = jax.random.normal(k_b1, (1, D0), dtype=jnp.float32) * 0.01
    alpha = 1.0 + 0.1 * jax.random.normal(k_a, (1, D0), dtype=jnp.float32)  # Norm(D0).alpha
    beta = 0.05 * jax.random.normal(k_be, (1, D0), dtype=jnp.float32)       # Norm(D0).bias
    w2_t = jax.random.normal(k_w2, (D0, 1), dtype=jnp.float32) * 0.05       # Linear(D0, 1).weight^T
    b2 = jax.random.normal(k_b2, (1, 1), dtype=jnp.float32) * 0.01

    ref = reference(x, w1_t, b1, alpha, beta, w2_t, b2)

    # f32-MXU + exact reciprocal: tight check of the fused/folded math.
    out_f32 = output_feed_forward(x, w1_t, b1, alpha, beta, w2_t, b2,
                                  use_bf16_mxu=False, approx_reciprocal=False)
    out_f32 = jax.block_until_ready(out_f32)
    assert out_f32.shape == (B, 1)
    assert jnp.allclose(out_f32, ref, atol=5e-3, rtol=5e-3), (out_f32, ref)

    # Default path (auto bf16 on v6e/v7x, approx reciprocal): looser tolerance.
    out = output_feed_forward(x, w1_t, b1, alpha, beta, w2_t, b2)
    out = jax.block_until_ready(out)
    assert out.shape == (B, 1)
    assert jnp.allclose(out, ref, atol=3e-2, rtol=3e-2), (out, ref)

    print("KERNEL_OK")
</pallas_src>

<mosaic_0001>
module attributes {stable_mosaic.version = 11 : i64} {
  func.func @_off_kernel(%arg0: i32, %arg1: memref<16x32xf32, #tpu.memory_space<vmem>>, %arg2: memref<32x128xf32, #tpu.memory_space<vmem>>, %arg3: memref<1x128xf32, #tpu.memory_space<vmem>>, %arg4: memref<128x128xf32, #tpu.memory_space<vmem>>, %arg5: memref<2xf32, #tpu.memory_space<smem>>, %arg6: memref<16x1xf32, #tpu.memory_space<vmem>>) attributes {dimension_semantics = [#tpu.dimension_semantics<parallel>], iteration_bounds = array<i64: 2>, scalar_prefetch = 0 : i64, scratch_operands = 0 : i64, tpu.core_type = #tpu.core_type<tc>, window_params = [{transform_indices = @transform_0, window_bounds = array<i64: 16, 32>}, {pipeline_mode = #tpu.pipeline_mode<synchronous>, transform_indices = @transform_1, window_bounds = array<i64: 32, 128>}, {pipeline_mode = #tpu.pipeline_mode<synchronous>, transform_indices = @transform_2, window_bounds = array<i64: 1, 128>}, {pipeline_mode = #tpu.pipeline_mode<synchronous>, transform_indices = @transform_3, window_bounds = array<i64: 128, 128>}, {transform_indices = @transform_4, window_bounds = array<i64: 2>}, {transform_indices = @transform_5, window_bounds = array<i64: 16, 1>}]} {
    %c0 = arith.constant 0 : index
    %c0_0 = arith.constant 0 : index
    %0 = vector.load %arg2[%c0, %c0_0] : memref<32x128xf32, #tpu.memory_space<vmem>>, vector<32x128xf32>
    %c0_1 = arith.constant 0 : index
    %c0_2 = arith.constant 0 : index
    %1 = vector.load %arg1[%c0_1, %c0_2] : memref<16x32xf32, #tpu.memory_space<vmem>>, vector<16x32xf32>
    %cst = arith.constant dense<0.000000e+00> : vector<16x128xf32>
    %2 = tpu.matmul %1, %0, %cst {dimension_numbers = #tpu.dot_dimension_numbers<[1], [0], [0], [1], [0, 0, 1, 1], [], []>} : vector<16x32xf32>, vector<32x128xf32>, vector<16x128xf32> -> vector<16x128xf32>
    %c0_3 = arith.constant 0 : index
    %c0_4 = arith.constant 0 : index
    %3 = vector.load %arg3[%c0_3, %c0_4] : memref<1x128xf32, #tpu.memory_space<vmem>>, vector<1x128xf32>
    %4 = vector.broadcast %3 : vector<1x128xf32> to vector<16x128xf32>
    %5 = arith.addf %2, %4 : vector<16x128xf32>
    %cst_5 = arith.constant 0.000000e+00 : f32
    %6 = vector.broadcast %cst_5 : f32 to vector<16x128xf32>
    %7 = arith.maximumf %5, %6 : vector<16x128xf32>
    %c0_6 = arith.constant 0 : index
    %c0_7 = arith.constant 0 : index
    %8 = vector.load %arg4[%c0_6, %c0_7] : memref<128x128xf32, #tpu.memory_space<vmem>>, vector<128x128xf32>
    %cst_8 = arith.constant dense<0.000000e+00> : vector<16x128xf32>
    %9 = tpu.matmul %7, %8, %cst_8 {dimension_numbers = #tpu.dot_dimension_numbers<[1], [0], [0], [1], [0, 0, 1, 1], [], []>} : vector<16x128xf32>, vector<128x128xf32>, vector<16x128xf32> -> vector<16x128xf32>
    %10 = vector.extract_strided_slice %9 {offsets = [0, 0], sizes = [16, 1], strides = [1, 1]} : vector<16x128xf32> to vector<16x1xf32>
    %11 = vector.extract_strided_slice %9 {offsets = [0, 1], sizes = [16, 1], strides = [1, 1]} : vector<16x128xf32> to vector<16x1xf32>
    %12 = arith.mulf %7, %7 : vector<16x128xf32>
    %cst_9 = arith.constant dense<0.000000e+00> : vector<16xf32>
    %13 = vector.multi_reduction <add>, %12, %cst_9 [1] : vector<16x128xf32> to vector<16xf32>
    %14 = vector.shape_cast %13 : vector<16xf32> to vector<16x1xf32>
    %cst_10 = arith.constant 7.812500e-03 : f32
    %15 = vector.broadcast %cst_10 : f32 to vector<16x1xf32>
    %16 = arith.mulf %10, %15 : vector<16x1xf32>
    %17 = arith.mulf %10, %16 : vector<16x1xf32>
    %18 = arith.subf %14, %17 : vector<16x1xf32>
    %cst_11 = arith.constant 0.00787401571 : f32
    %19 = vector.broadcast %cst_11 : f32 to vector<16x1xf32>
    %20 = arith.mulf %18, %19 : vector<16x1xf32>
    %cst_12 = arith.constant 0.000000e+00 : f32
    %21 = vector.broadcast %cst_12 : f32 to vector<16x1xf32>
    %22 = arith.maximumf %20, %21 : vector<16x1xf32>
    %23 = math.sqrt %22 : vector<16x1xf32>
    %cst_13 = arith.constant 9.99999997E-7 : f32
    %24 = vector.broadcast %cst_13 : f32 to vector<16x1xf32>
    %25 = arith.addf %23, %24 : vector<16x1xf32>
    %cst_14 = arith.constant 1.000000e+00 : f32
    %26 = vector.broadcast %cst_14 : f32 to vector<16x1xf32>
    %27 = arith.divf %26, %25 : vector<16x1xf32>
    %c0_15 = arith.constant 0 : index
    %28 = memref.load %arg5[%c0_15] : memref<2xf32, #tpu.memory_space<smem>>
    %c1 = arith.constant 1 : index
    %29 = memref.load %arg5[%c1] : memref<2xf32, #tpu.memory_space<smem>>
    %30 = vector.broadcast %29 : f32 to vector<16x1xf32>
    %31 = arith.mulf %16, %30 : vector<16x1xf32>
    %32 = arith.subf %11, %31 : vector<16x1xf32>
    %33 = arith.mulf %32, %27 : vector<16x1xf32>
    %34 = vector.broadcast %28 : f32 to vector<16x1xf32>
    %35 = arith.addf %33, %34 : vector<16x1xf32>
    %c0_16 = arith.constant 0 : index
    %c0_17 = arith.constant 0 : index
    %36 = vector.load %arg6[%c0_16, %c0_17] : memref<16x1xf32, #tpu.memory_space<vmem>>, vector<16x1xf32>
    tpu.vector_store %arg6[%c0_16, %c0_17], %35 {strides = array<i32>} : memref<16x1xf32, #tpu.memory_space<vmem>>, vector<16x1xf32>,
    return
  }
  func.func @transform_0(%arg0: i32) -> (i32, i32) {
    %c0_i32 = arith.constant 0 : i32
    %c0_i32_0 = arith.constant 0 : i32
    return %arg0, %c0_i32 : i32, i32
  }
  func.func @transform_1(%arg0: i32) -> (i32, i32) {
    %c0_i32 = arith.constant 0 : i32
    %c0_i32_0 = arith.constant 0 : i32
    %c0_i32_1 = arith.constant 0 : i32
    return %c0_i32, %c0_i32_0 : i32, i32
  }
  func.func @transform_2(%arg0: i32) -> (i32, i32) {
    %c0_i32 = arith.constant 0 : i32
    %c0_i32_0 = arith.constant 0 : i32
    %c0_i32_1 = arith.constant 0 : i32
    return %c0_i32, %c0_i32_0 : i32, i32
  }
  func.func @transform_3(%arg0: i32) -> (i32, i32) {
    %c0_i32 = arith.constant 0 : i32
    %c0_i32_0 = arith.constant 0 : i32
    %c0_i32_1 = arith.constant 0 : i32
    return %c0_i32, %c0_i32_0 : i32, i32
  }
  func.func @transform_4(%arg0: i32) -> i32 {
    %c0_i32 = arith.constant 0 : i32
    %c0_i32_0 = arith.constant 0 : i32
    return %c0_i32 : i32
  }
  func.func @transform_5(%arg0: i32) -> (i32, i32) {
    %c0_i32 = arith.constant 0 : i32
    %c0_i32_0 = arith.constant 0 : i32
    return %arg0, %c0_i32 : i32, i32
  }
}

</mosaic_0001>

<llo_original>
// kernel: tpu_custom_call.1
$region0: #{tpu_custom_call.1}
  #allocation0 [shape = 'u32[]', space=smem, size = 0x4, offset = 0x4, fixed_abs, tag = 'smem constant byte address 0x4 - core index']
  #allocation1 [shape = 'u32[144,128]{1,0:T(1,128)}', space=vmem, size = 0x12000, scoped, tag = 'internal scratch']
  %s0 = inlined_call_operand.hbm [shape: f32[20,32], index: 0, kind: input, shape index: {}]
  %s1 = inlined_call_operand.hbm [shape: f32[32,128], index: 1, kind: input, shape index: {}]
  %s2 = inlined_call_operand.vmem [shape: f32[1,128], index: 2, kind: input, shape index: {}]
  %s3 = inlined_call_operand.hbm [shape: f32[128,128], index: 3, kind: input, shape index: {}]
  %s4 = inlined_call_operand.vmem [shape: f32[2], index: 4, kind: input, shape index: {}]
  %s5 = inlined_call_operand.vmem [shape: f32[20,1], index: 5, kind: output, shape index: {}]
  %s6 = sld [smem:[#allocation0]]
  $region117: #{tpu_custom_call.1} parent=0
    _
  %s8 = ssub.s32 1, %s6
  %s9 = scalar_select 0, %s8, %s6
  $region1: #{tpu_custom_call.1} parent=0
    #allocation2 [shape = 'u8[16384]{0}', space=vmem, size = 0x4000, scoped, tag = 'input window, operand 0']
    #allocation3 [shape = 's32[2]{0}', space=sflag, size = 0x8, scoped, tag = 'scoped memory for tpu_custom_call.1']
    #allocation4 [shape = 's32[2]{0}', space=sflag, size = 0x8, scoped, tag = 'scoped memory for tpu_custom_call.1']
    #allocation5 [shape = 'u8[16384]{0}', space=vmem, size = 0x4000, scoped, tag = 'input window, operand 1, single buffered']
    #allocation6 [shape = 's32[1]{0}', space=sflag, size = 0x4, scoped, tag = 'scoped memory for tpu_custom_call.1']
    #allocation7 [shape = 'u8[65536]{0}', space=vmem, size = 0x10000, scoped, tag = 'input window, operand 3, single buffered']
    #allocation8 [shape = 'u8[512]{0}', space=smem, size = 0x200, scoped, tag = 'input window, operand 4, single buffered']
    #allocation9 [shape = 'u8[16384]{0}', space=vmem, size = 0x4000, scoped, tag = 'output window, operand 0']
    %10 = vsyncpa [#allocation3], 0
    %s11 = scalar_lea.sflag [#allocation3], 1
    %12 = vsyncpa %s11, 0
    %13 = vsyncpa [#allocation6], 0
    %14 = vsyncpa [#allocation4], 0
    loop: start=0, step=1, limit=4
    $region2: #{tpu_custom_call.1} parent=1 // loop_pre_header
      _
    $region3: #{tpu_custom_call.1} parent=1 // loop_header
      %s16 = sphi 0, %s20
      %p17 = scmp.ge.s32.totalorder %s16, 4
      %s26 = sphi 0, %s28
      %s29 = sphi 0, %s26
      %s30 = sphi 0, %s29
      %s46 = sphi 0, %s30
      %s50 = sphi 0, %s50
      %s52 = sphi 0, %s50
      %s53 = sphi 0, %s52
      %s67 = sphi 0, %s53
      %s71 = sphi 0, %s71
      %s73 = sphi 0, %s71
      %s74 = sphi 0, %s73
      %s88 = sphi 0, %s74
      %s92 = sphi 0, %s92
      %s94 = sphi 0, %s92
      %s95 = sphi 0, %s94
      %s109 = sphi 0, %s95
      %s113 = sphi 0, %s113
      %s115 = sphi 0, %s113
      %s116 = sphi 0, %s115
      %s130 = sphi 0, %s116
      %s136 = sphi 0, %s138
      %s139 = sphi 0, %s136
      %s140 = sphi 0, %s139
      %s156 = sphi 0, %s140
    $region4: #{tpu_custom_call.1} parent=1 // loop_header_branch
      %19 = sbr.rel (%p17) target = $region8
    $region5: #{tpu_custom_call.1} parent=1 // loop_body
      %s21 = ssub.s32 %s16, 1
      %s22 = ssub.s32 %s16, 2
      %s23 = sadd.s32 %s16, 1
      %s24 = ssub.s32 %s16, %s23
      %p25 = scmp.eq.s32.totalorder %s24, 0
      %s27 = sadd.s32 %s26, 1
      %s28 = scalar_select %p25, %s26, %s27
      %p31 = pneg %p25
      %p32 = scmp.eq.s32.totalorder %s16, 1
      %p33 = por %p31, %p32
      %p34 = scmp.ne.s32.totalorder %s26, %s29
      %p35 = scmp.eq.s32.totalorder %s16, 0
      %p36 = por %p34, %p35
      %p37 = scmp.ne.s32.totalorder %s26, %s29
      %p38 = scmp.eq.s32.totalorder %s21, 1
      %p39 = por %p37, %p38
      %p40 = scmp.ne.s32.totalorder %s29, %s30
      %p41 = scmp.eq.s32.totalorder %s21, 0
      %p42 = por %p40, %p41
      %p43 = scmp.ne.s32.totalorder %s29, %s30
      %p44 = scmp.eq.s32.totalorder %s22, 1
      %p45 = por %p43, %p44
      %p47 = scmp.ne.s32.totalorder %s30, %s46
      %p48 = scmp.eq.s32.totalorder %s22, 0
      %p49 = por %p47, %p48
      %s51 = sadd.s32 %s50, 1
      %p54 = scmp.eq.s32.totalorder %s16, 1
      %p55 = scmp.ne.s32.totalorder %s50, %s52
      %p56 = scmp.eq.s32.totalorder %s16, 0
      %p57 = por %p55, %p56
      %p58 = scmp.ne.s32.totalorder %s50, %s52
      %p59 = scmp.eq.s32.totalorder %s21, 1
      %p60 = por %p58, %p59
      %p61 = scmp.ne.s32.totalorder %s52, %s53
      %p62 = scmp.eq.s32.totalorder %s21, 0
      %p63 = por %p61, %p62
      %p64 = scmp.ne.s32.totalorder %s52, %s53
      %p65 = scmp.eq.s32.totalorder %s22, 1
      %p66 = por %p64, %p65
      %p68 = scmp.ne.s32.totalorder %s53, %s67
      %p69 = scmp.eq.s32.totalorder %s22, 0
      %p70 = por %p68, %p69
      %s72 = sadd.s32 %s71, 1
      %p75 = scmp.eq.s32.totalorder %s16, 1
      %p76 = scmp.ne.s32.totalorder %s71, %s73
      %p77 = scmp.eq.s32.totalorder %s16, 0
      %p78 = por %p76, %p77
      %p79 = scmp.ne.s32.totalorder %s71, %s73
      %p80 = scmp.eq.s32.totalorder %s21, 1
      %p81 = por %p79, %p80
      %p82 = scmp.ne.s32.totalorder %s73, %s74
      %p83 = scmp.eq.s32.totalorder %s21, 0
      %p84 = por %p82, %p83
      %p85 = scmp.ne.s32.totalorder %s73, %s74
      %p86 = scmp.eq.s32.totalorder %s22, 1
      %p87 = por %p85, %p86
      %p89 = scmp.ne.s32.totalorder %s74, %s88
      %p90 = scmp.eq.s32.totalorder %s22, 0
      %p91 = por %p89, %p90
      %s93 = sadd.s32 %s92, 1
      %p96 = scmp.eq.s32.totalorder %s16, 1
      %p97 = scmp.ne.s32.totalorder %s92, %s94
      %p98 = scmp.eq.s32.totalorder %s16, 0
      %p99 = por %p97, %p98
      %p100 = scmp.ne.s32.totalorder %s92, %s94
      %p101 = scmp.eq.s32.totalorder %s21, 1
      %p102 = por %p100, %p101
      %p103 = scmp.ne.s32.totalorder %s94, %s95
      %p104 = scmp.eq.s32.totalorder %s21, 0
      %p105 = por %p103, %p104
      %p106 = scmp.ne.s32.totalorder %s94, %s95
      %p107 = scmp.eq.s32.totalorder %s22, 1
      %p108 = por %p106, %p107
      %p110 = scmp.ne.s32.totalorder %s95, %s109
      %p111 = scmp.eq.s32.totalorder %s22, 0
      %p112 = por %p110, %p111
      %s114 = sadd.s32 %s113, 1
      %p117 = scmp.eq.s32.totalorder %s16, 1
      %p118 = scmp.ne.s32.totalorder %s113, %s115
      %p119 = scmp.eq.s32.totalorder %s16, 0
      %p120 = por %p118, %p119
      %p121 = scmp.ne.s32.totalorder %s113, %s115
      %p122 = scmp.eq.s32.totalorder %s21, 1
      %p123 = por %p121, %p122
      %p124 = scmp.ne.s32.totalorder %s115, %s116
      %p125 = scmp.eq.s32.totalorder %s21, 0
      %p126 = por %p124, %p125
      %p127 = scmp.ne.s32.totalorder %s115, %s116
      %p128 = scmp.eq.s32.totalorder %s22, 1
      %p129 = por %p127, %p128
      %p131 = scmp.ne.s32.totalorder %s116, %s130
      %p132 = scmp.eq.s32.totalorder %s22, 0
      %p133 = por %p131, %p132
      %s134 = ssub.s32 %s16, %s23
      %p135 = scmp.eq.s32.totalorder %s134, 0
      %s137 = sadd.s32 %s136, 1
      %s138 = scalar_select %p135, %s136, %s137
      %p141 = pneg %p135
      %p142 = scmp.eq.s32.totalorder %s16, 1
      %p143 = por %p141, %p142
      %p144 = scmp.ne.s32.totalorder %s136, %s139
      %p145 = scmp.eq.s32.totalorder %s16, 0
      %p146 = por %p144, %p145
      %p147 = scmp.ne.s32.totalorder %s136, %s139
      %p148 = scmp.eq.s32.totalorder %s21, 1
      %p149 = por %p147, %p148
      %p150 = scmp.ne.s32.totalorder %s139, %s140
      %p151 = scmp.eq.s32.totalorder %s21, 0
      %p152 = por %p150, %p151
      %p153 = scmp.ne.s32.totalorder %s139, %s140
      %p154 = scmp.eq.s32.totalorder %s22, 1
      %p155 = por %p153, %p154
      %p157 = scmp.ne.s32.totalorder %s140, %s156
      %p158 = scmp.eq.s32.totalorder %s22, 0
      %p159 = por %p157, %p158
      %p160 = scmp.le.s32.totalorder 1, %s16
      %p161 = scmp.lt.s32.totalorder %s16, 3
      %p162 = pnand %p160, %p161
      %p163 = pneg %p162
      // Predicated region
      $region9: #{tpu_custom_call.1} parent=5 // pred_check
        _
      $region10: #{tpu_custom_call.1} parent=5 // pred_check_branch
        %165 = sbr.rel (%p162) target = $region12
      $region11: #{tpu_custom_call.1} parent=5 // pred_region
        %s166 = ssub.s32 %s16, 1
        // Predicated region
        $region13: #{tpu_custom_call.1} parent=11 // pred_check
          %p167 = pneg %p63
        $region14: #{tpu_custom_call.1} parent=11 // pred_check_branch
          %169 = sbr.rel (%p167) target = $region16
        $region15: #{tpu_custom_call.1} parent=11 // pred_region
          %s171 = ssub.s32 512, 512
          %172 = vsyncadd [#allocation6], %s171
          %s173 = sshll.u32 [#allocation5], 4
          %s174 = int_to_ptr.vmem [resolvable:$true] %s173
          %179 = dma.hbm_to_vmem [thread:$0]  %s1, 512, %s174, [#allocation6], 128, 128, 8
        $region16: #{tpu_custom_call.1} parent=11 // pred_fallthru
          _
        // Predicated region
        $region17: #{tpu_custom_call.1} parent=11 // pred_check
          %p180 = pneg %p84
        $region18: #{tpu_custom_call.1} parent=11 // pred_check_branch
          %182 = sbr.rel (%p180) target = $region20
        $region19: #{tpu_custom_call.1} parent=11 // pred_region
          _
        $region20: #{tpu_custom_call.1} parent=11 // pred_fallthru
          _
        // Predicated region
        $region21: #{tpu_custom_call.1} parent=11 // pred_check
          %p183 = pneg %p105
        $region22: #{tpu_custom_call.1} parent=11 // pred_check_branch
          %185 = sbr.rel (%p183) target = $region24
        $region23: #{tpu_custom_call.1} parent=11 // pred_region
          %s187 = ssub.s32 2048, 2048
          %188 = vsyncadd [#allocation6], %s187
          %s189 = sshll.u32 [#allocation7], 4
          %s190 = int_to_ptr.vmem [resolvable:$true] %s189
          %195 = dma.hbm_to_vmem [thread:$0]  %s3, 2048, %s190, [#allocation6], 128, 128, 8
        $region24: #{tpu_custom_call.1} parent=11 // pred_fallthru
          _
        // Predicated region
        $region25: #{tpu_custom_call.1} parent=11 // pred_check
          %p196 = pneg %p126
        $region26: #{tpu_custom_call.1} parent=11 // pred_check_branch
          %198 = sbr.rel (%p196) target = $region28
        $region27: #{tpu_custom_call.1} parent=11 // pred_region
          %s200 = ssub.s32 16, 16
          %201 = vsyncadd [#allocation4], %s200
          %s203 = sshll.u32 %s4, 4
          %s204 = int_to_ptr.vmem [resolvable:$true] %s203
          %206 = dma.vmem_to_smem %s204, 16, [#allocation8], [#allocation4]
        $region28: #{tpu_custom_call.1} parent=11 // pred_fallthru
          _
      $region12: #{tpu_custom_call.1} parent=5 // pred_fallthru
        _
      %p207 = scmp.lt.s32.totalorder %s16, 2
      // Predicated region
      $region29: #{tpu_custom_call.1} parent=5 // pred_check
        %p208 = pneg %p207
      $region30: #{tpu_custom_call.1} parent=5 // pred_check_branch
        %210 = sbr.rel (%p208) target = $region32
      $region31: #{tpu_custom_call.1} parent=5 // pred_region
        // Predicated region
        $region33: #{tpu_custom_call.1} parent=31 // pred_check
          %p211 = pneg %p36
        $region34: #{tpu_custom_call.1} parent=31 // pred_check_branch
          %213 = sbr.rel (%p211) target = $region36
        $region35: #{tpu_custom_call.1} parent=31 // pred_region
          %s214 = sand.u32 %s26, 1
          %s215 = scalar_lea.sflag [#allocation3], %s214
          %s216 = sand.u32 %s26, 1
          %s217 = smul.addr %s216, 16
          %s218 = scalar_lea.vmem [#allocation2], %s217
          %s219 = smul.u32 2, %s16
          %s220 = ssub.s32 3, %s219
          %p221 = scmp.lt.s32.totalorder %s220, 2
          %s222 = scalar_select %p221, %s220, 2
          %s223 = smul.u32 128, %s222
          %s225 = ssub.s32 256, %s223
          %226 = vsyncadd %s215, %s225
          %p227 = scmp.ne.s32.totalorder 0, %s223
          %s228 = smul.addr %s219, 128
          %s229 = scalar_lea.hbm %s0, %s228
          %s230 = smul.u32 8, %s222
          %s231 = sshll.u32 %s218, 4
          %s232 = int_to_ptr.vmem [resolvable:$true] %s231
          %s233 = sshll.u32 %s230, 4
          %237 = dma.hbm_to_vmem [thread:$0]  (%p227), %s229, %s233, %s232, %s215, 128, 128, 8
        $region36: #{tpu_custom_call.1} parent=31 // pred_fallthru
          _
      $region32: #{tpu_custom_call.1} parent=5 // pred_fallthru
        _
      %p238 = scmp.le.s32.totalorder 1, %s16
      %p239 = scmp.lt.s32.totalorder %s16, 3
      %p240 = pnand %p238, %p239
      %p241 = pneg %p240
      // Predicated region
      $region37: #{tpu_custom_call.1} parent=5 // pred_check
        _
      $region38: #{tpu_custom_call.1} parent=5 // pred_check_branch
        %243 = sbr.rel (%p240) target = $region40
      $region39: #{tpu_custom_call.1} parent=5 // pred_region
        %s244 = ssub.s32 %s16, 1
        %s245 = sand.u32 %s29, 1
        %s246 = scalar_lea.sflag [#allocation3], %s245
        %s247 = sand.u32 %s29, 1
        %s248 = smul.addr %s247, 16
        %s249 = scalar_lea.vmem [#allocation2], %s248
        // Predicated region
        $region41: #{tpu_custom_call.1} parent=39 // pred_check
          %p250 = pneg %p42
        $region42: #{tpu_custom_call.1} parent=39 // pred_check_branch
          %252 = sbr.rel (%p250) target = $region44
        $region43: #{tpu_custom_call.1} parent=39 // pred_region
          %253 = dma.done %s246, 256
        $region44: #{tpu_custom_call.1} parent=39 // pred_fallthru
          _
        // Predicated region
        $region45: #{tpu_custom_call.1} parent=39 // pred_check
          %p254 = pneg %p63
        $region46: #{tpu_custom_call.1} parent=39 // pred_check_branch
          %256 = sbr.rel (%p254) target = $region48
        $region47: #{tpu_custom_call.1} parent=39 // pred_region
          %257 = dma.done [#allocation6], 512
        $region48: #{tpu_custom_call.1} parent=39 // pred_fallthru
          _
        // Predicated region
        $region49: #{tpu_custom_call.1} parent=39 // pred_check
          %p258 = pneg %p105
        $region50: #{tpu_custom_call.1} parent=39 // pred_check_branch
          %260 = sbr.rel (%p258) target = $region52
        $region51: #{tpu_custom_call.1} parent=39 // pred_region
          %261 = dma.done [#allocation6], 2048
        $region52: #{tpu_custom_call.1} parent=39 // pred_fallthru
          _
        // Predicated region
        $region53: #{tpu_custom_call.1} parent=39 // pred_check
          %p262 = pneg %p126
        $region54: #{tpu_custom_call.1} parent=39 // pred_check_branch
          %264 = sbr.rel (%p262) target = $region56
        $region55: #{tpu_custom_call.1} parent=39 // pred_region
          %265 = dma.done [#allocation4], 16
        $region56: #{tpu_custom_call.1} parent=39 // pred_fallthru
          _
        %266 = sfence
        %s267 = sand.u32 %s29, 1
        %s268 = scalar_lea.sflag [#allocation3], %s267
        %s269 = sand.u32 %s29, 1
        %s270 = smul.addr %s269, 16
        %s271 = scalar_lea.vmem [#allocation2], %s270
        %p272 = pneg %p42
        %p273 = pneg %p39
        %p274 = pneg %p63
        %p275 = pneg %p60
        %p276 = pneg %p84
        %p277 = pneg %p81
        %p278 = pneg %p105
        %p279 = pneg %p102
        %p280 = pneg %p126
        %p281 = pneg %p123
        %p282 = pneg %p152
        %p283 = pneg %p149
        %s284 = sand.u32 %s139, 1
        %s285 = sand.u32 %s139, 1
        %s286 = smul.addr %s285, 16
        %s287 = scalar_lea.vmem [#allocation9], %s286
        %s288 = smul.u32 2, %s21
        %s289 = ssub.s32 3, %s288
        %p290 = scmp.lt.s32.totalorder %s289, 2
        %s291 = scalar_select %p290, %s289, 2
        %s292 = smul.u32 128, %s291
        %s293 = smul.u32 2, %s21
        %s294 = ssub.s32 3, %s293
        %p295 = scmp.lt.s32.totalorder %s294, 2
        %s296 = scalar_select %p295, %s294, 2
        %s297 = smul.u32 128, %s296
        %v298 = vld [vmem:[#allocation5] sm:$0xff]
        %v299 = vld [vmem:[#allocation5 + $0x8] sm:$0xff]
        %v300 = vld [vmem:[#allocation5 + $0x10] sm:$0xff]
        %v301 = vld [vmem:[#allocation5 + $0x18] sm:$0xff]
        %v302 = vld [vmem:[%s249] sm:$0xff]
        %v303 = vld [vmem:[%s249 + $0x8] sm:$0xff]
        %v304 = vld [vmem:[%s2] sm:$0x1]
        %v306 = vlaneseq
        %v307 = vshrl.u32 %v306, 7
        %v308 = vsub.s32 0, %v307
        %v309 = vrot.slane %v304, %v308
        %vm311 = vcmask 261120
        %v313 = vsel %vm311, %v302, 0
        %v316 = vsel %vm311, %v303, 0
        %318 = vmatprep.subr.mxu0 0.0
        %319 = vmatpush1.msra.mxu0 0.0
        %320 = vmatprep.subr.mxu0 0.0
        %321 = vmatpush1.msra.mxu0 0.0
        %322 = vmatprep.subr.mxu0 0.0
        %323 = vmatpush1.msra.mxu0 0.0
        %324 = vmatprep.subr.mxu0 0.0
        %325 = vmatpush1.msra.mxu0 0.0
        %326 = vmatprep.subr.mxu0 0.0
        %327 = vmatpush1.msra.mxu0 0.0
        %328 = vmatprep.subr.mxu0 0.0
        %329 = vmatpush1.msra.mxu0 0.0
        %330 = vmatprep.subr.mxu0 0.0
        %331 = vmatpush1.msra.mxu0 0.0
        %332 = vmatprep.subr.mxu0 0.0
        %333 = vmatpush1.msra.mxu0 0.0
        %334 = vmatprep.subr.mxu0 0.0
        %335 = vmatpush1.msra.mxu0 0.0
        %336 = vmatprep.subr.mxu0 0.0
        %337 = vmatpush1.msra.mxu0 0.0
        %338 = vmatprep.subr.mxu0 0.0
        %339 = vmatpush1.msra.mxu0 0.0
        %340 = vmatprep.subr.mxu0 0.0
        %341 = vmatpush1.msra.mxu0 0.0
        %342 = vmatprep.subr.mxu0 0.0
        %343 = vmatpush1.msra.mxu0 %v301
        %344 = vmatprep.subr.mxu0 0.0
        %345 = vmatpush1.msra.mxu0 %v300
        %346 = vmatprep.subr.mxu0 0.0
        %347 = vmatpush1.msra.mxu0 %v299
        %348 = vmatprep.subr.mxu0 0.0
        %349 = vmatpush1.msra.mxu0 %v298
        %350 = vmatprep.subr.mxu0 0.0
        %351 = vmatpush2.msra.mxu0 0.0
        %352 = vmatprep.subr.mxu0 0.0
        %353 = vmatpush2.msra.mxu0 0.0
        %354 = vmatprep.subr.mxu0 0.0
        %355 = vmatpush2.msra.mxu0 0.0
        %356 = vmatprep.subr.mxu0 0.0
        %357 = vmatpush2.msra.mxu0 0.0
        %358 = vmatprep.subr.mxu0 0.0
        %359 = vmatpush2.msra.mxu0 0.0
        %360 = vmatprep.subr.mxu0 0.0
        %361 = vmatpush2.msra.mxu0 0.0
        %362 = vmatprep.subr.mxu0 0.0
        %363 = vmatpush2.msra.mxu0 0.0
        %364 = vmatprep.subr.mxu0 0.0
        %365 = vmatpush2.msra.mxu0 0.0
        %366 = vmatprep.subr.mxu0 0.0
        %367 = vmatpush2.msra.mxu0 0.0
        %368 = vmatprep.subr.mxu0 0.0
        %369 = vmatpush2.msra.mxu0 0.0
        %370 = vmatprep.subr.mxu0 0.0
        %371 = vmatpush2.msra.mxu0 0.0
        %372 = vmatprep.subr.mxu0 0.0
        %373 = vmatpush2.msra.mxu0 0.0
        %374 = vmatprep.subr.mxu0 0.0
        %375 = vmatpush2.msra.mxu0 0.0
        %376 = vmatprep.subr.mxu0 0.0
        %377 = vmatpush2.msra.mxu0 0.0
        %378 = vmatprep.subr.mxu0 0.0
        %379 = vmatpush2.msra.mxu0 0.0
        %380 = vmatprep.subr.mxu0 0.0
        %381 = vmatpush2.msra.mxu0 0.0
        %382 = vmatprep.mubr.f32.mxu0 0.0
        %383 = vmatmul.mubr.f32.gmra.mxu0 %v313
        %v384 = vpop.f32.mrf.mxu0
        %v385 = vadd.f32 %v309, %v384
        %v386 = vpop.f32.mrf.mxu0
        %387 = vmatprep.mubr.f32.mxu0 0.0
        %388 = vmatmul.mubr.f32.gmra.mxu0 %v316
        %v389 = vpop.f32.mrf.mxu0
        %v390 = vadd.f32 %v309, %v389
        %v391 = vpop.f32.mrf.mxu0
        %392 = vdwg.mxu0
        %v393 = vmax.f32 %v385, 0.0
        %v394 = vmax.f32 %v390, 0.0
        %v395 = vld [vmem:[#allocation7] sm:$0xff]
        %v396 = vld [vmem:[#allocation7 + $0x8] sm:$0xff]
        %v397 = vld [vmem:[#allocation7 + $0x10] sm:$0xff]
        %v398 = vld [vmem:[#allocation7 + $0x18] sm:$0xff]
        %v399 = vld [vmem:[#allocation7 + $0x20] sm:$0xff]
        %v400 = vld [vmem:[#allocation7 + $0x28] sm:$0xff]
        %v401 = vld [vmem:[#allocation7 + $0x30] sm:$0xff]
        %v402 = vld [vmem:[#allocation7 + $0x38] sm:$0xff]
        %v403 = vld [vmem:[#allocation7 + $0x40] sm:$0xff]
        %v404 = vld [vmem:[#allocation7 + $0x48] sm:$0xff]
        %v405 = vld [vmem:[#allocation7 + $0x50] sm:$0xff]
        %v406 = vld [vmem:[#allocation7 + $0x58] sm:$0xff]
        %v407 = vld [vmem:[#allocation7 + $0x60] sm:$0xff]
        %v408 = vld [vmem:[#allocation7 + $0x68] sm:$0xff]
        %v409 = vld [vmem:[#allocation7 + $0x70] sm:$0xff]
        %v410 = vld [vmem:[#allocation7 + $0x78] sm:$0xff]
        %411 = vmatprep.subr.mxu0 0.0
        %412 = vmatpush1.msra.mxu0 %v410
        %413 = vmatprep.subr.mxu0 0.0
        %414 = vmatpush1.msra.mxu0 %v409
        %415 = vmatprep.subr.mxu0 0.0
        %416 = vmatpush1.msra.mxu0 %v408
        %417 = vmatprep.subr.mxu0 0.0
        %418 = vmatpush1.msra.mxu0 %v407
        %419 = vmatprep.subr.mxu0 0.0
        %420 = vmatpush1.msra.mxu0 %v406
        %421 = vmatprep.subr.mxu0 0.0
        %422 = vmatpush1.msra.mxu0 %v405
        %423 = vmatprep.subr.mxu0 0.0
        %424 = vmatpush1.msra.mxu0 %v404
        %425 = vmatprep.subr.mxu0 0.0
        %426 = vmatpush1.msra.mxu0 %v403
        %427 = vmatprep.subr.mxu0 0.0
        %428 = vmatpush1.msra.mxu0 %v402
        %429 = vmatprep.subr.mxu0 0.0
        %430 = vmatpush1.msra.mxu0 %v401
        %431 = vmatprep.subr.mxu0 0.0
        %432 = vmatpush1.msra.mxu0 %v400
        %433 = vmatprep.subr.mxu0 0.0
        %434 = vmatpush1.msra.mxu0 %v399
        %435 = vmatprep.subr.mxu0 0.0
        %436 = vmatpush1.msra.mxu0 %v398
        %437 = vmatprep.subr.mxu0 0.0
        %438 = vmatpush1.msra.mxu0 %v397
        %439 = vmatprep.subr.mxu0 0.0
        %440 = vmatpush1.msra.mxu0 %v396
        %441 = vmatprep.subr.mxu0 0.0
        %442 = vmatpush1.msra.mxu0 %v395
        %443 = vmatprep.subr.mxu0 0.0
        %444 = vmatpush2.msra.mxu0 0.0
        %445 = vmatprep.subr.mxu0 0.0
        %446 = vmatpush2.msra.mxu0 0.0
        %447 = vmatprep.subr.mxu0 0.0
        %448 = vmatpush2.msra.mxu0 0.0
        %449 = vmatprep.subr.mxu0 0.0
        %450 = vmatpush2.msra.mxu0 0.0
        %451 = vmatprep.subr.mxu0 0.0
        %452 = vmatpush2.msra.mxu0 0.0
        %453 = vmatprep.subr.mxu0 0.0
        %454 = vmatpush2.msra.mxu0 0.0
        %455 = vmatprep.subr.mxu0 0.0
        %456 = vmatpush2.msra.mxu0 0.0
        %457 = vmatprep.subr.mxu0 0.0
        %458 = vmatpush2.msra.mxu0 0.0
        %459 = vmatprep.subr.mxu0 0.0
        %460 = vmatpush2.msra.mxu0 0.0
        %461 = vmatprep.subr.mxu0 0.0
        %462 = vmatpush2.msra.mxu0 0.0
        %463 = vmatprep.subr.mxu0 0.0
        %464 = vmatpush2.msra.mxu0 0.0
        %465 = vmatprep.subr.mxu0 0.0
        %466 = vmatpush2.msra.mxu0 0.0
        %467 = vmatprep.subr.mxu0 0.0
        %468 = vmatpush2.msra.mxu0 0.0
        %469 = vmatprep.subr.mxu0 0.0
        %470 = vmatpush2.msra.mxu0 0.0
        %471 = vmatprep.subr.mxu0 0.0
        %472 = vmatpush2.msra.mxu0 0.0
        %473 = vmatprep.subr.mxu0 0.0
        %474 = vmatpush2.msra.mxu0 0.0
        %475 = vmatprep.mubr.f32.mxu0 0.0
        %476 = vmatmul.mubr.f32.gmra.mxu0 %v393
        %v477 = vpop.f32.mrf.mxu0
        %v478 = vadd.f32 0.0, %v477
        %v479 = vpop.f32.mrf.mxu0
        %480 = vmatprep.mubr.f32.mxu0 0.0
        %481 = vmatmul.mubr.f32.gmra.mxu0 %v394
        %v482 = vpop.f32.mrf.mxu0
        %v483 = vadd.f32 0.0, %v482
        %v484 = vpop.f32.mrf.mxu0
        %485 = vdwg.mxu0
        %v486 = vmul.f32 %v393, %v393
        %v487 = vmul.f32 %v394, %v394
        %488 = vadd.xlane.f32.xlu0 %v486
        %v489 = vpop.xlane.xlu0 %488
        %490 = vadd.xlane.f32.xlu0 %v487
        %v491 = vpop.xlane.xlu0 %490
        %v492 = vmul.f32 %v478, 0.0078125
        %v493 = vmul.f32 %v483, 0.0078125
        %v494 = vmul.f32 %v478, %v492
        %v495 = vmul.f32 %v483, %v493
        %v496 = vsub.f32 %v489, %v494
        %v497 = vsub.f32 %v491, %v495
        %v498 = vmul.f32 %v496, 0.007874016
        %v499 = vmul.f32 %v497, 0.007874016
        %v500 = vmax.f32 %v498, 0.0
        %v501 = vmax.f32 %v499, 0.0
        %v502 = vrsqrt.pop %v500
        %v503 = vmul.f32 %v500, %v502
        %vm504 = vcmp.eq.f32.partialorder %v500, inf
        %v505 = vsel %vm504, %v500, %v503
        %vm506 = vcmp.eq.f32.partialorder %v500, 0.0
        %v507 = vand.u32 %v500, 2147483648
        %v508 = vsel %vm506, %v507, %v505
        %v509 = vrsqrt.pop %v501
        %v510 = vmul.f32 %v501, %v509
        %vm511 = vcmp.eq.f32.partialorder %v501, inf
        %v512 = vsel %vm511, %v501, %v510
        %vm513 = vcmp.eq.f32.partialorder %v501, 0.0
        %v514 = vand.u32 %v501, 2147483648
        %v515 = vsel %vm513, %v514, %v512
        %v516 = vadd.f32 %v508, 1e-06
        %v517 = vadd.f32 %v515, 1e-06
        %v518 = vrcp.pop %v516
        %v519 = vmul.f32 1.0, %v518
        %v520 = vrcp.pop %v517
        %v521 = vmul.f32 1.0, %v520
        %s522 = sld [smem:[#allocation8]]
        %s523 = sld [smem:[#allocation8 + $0x1]]
        %v524 = vstv %s523
        %v525 = vmul.f32 %v492, %v524
        %v526 = vmul.f32 %v493, %v524
        %529 = vrot.lane.b32.xlu0 %v525, 1
        %v530 = vpop.permute.xlu0 %529
        %531 = vrot.lane.b32.xlu0 %v526, 1
        %v532 = vpop.permute.xlu0 %531
        %v535 = vsub.f32 %v478, %v530
        %v536 = vsub.f32 %v483, %v532
        %539 = vrot.lane.b32.xlu0 %v519, 1
        %v540 = vpop.permute.xlu0 %539
        %541 = vrot.lane.b32.xlu0 %v521, 1
        %v542 = vpop.permute.xlu0 %541
        %v545 = vmul.f32 %v535, %v540
        %v546 = vmul.f32 %v536, %v542
        %v547 = vstv %s522
        %v548 = vadd.f32 %v545, %v547
        %v549 = vadd.f32 %v546, %v547
        %552 = vrot.lane.b32.xlu0 %v548, 127
        %v553 = vpop.permute.xlu0 %552
        %554 = vrot.lane.b32.xlu0 %v549, 127
        %v555 = vpop.permute.xlu0 %554
        %vm558 = vcmask 7168
        %559 = vst.msk [vmem:[%s287] sm:$0xff] %vm558, %v553
        %560 = vst.msk [vmem:[%s287 + $0x8] sm:$0xff] %vm558, %v555
        %s561 = sand.u32 %s139, 1
        %s562 = sand.u32 %s139, 1
        %s563 = smul.addr %s562, 16
        %s564 = scalar_lea.vmem [#allocation9], %s563
        // Predicated region
        $region57: #{tpu_custom_call.1} parent=39 // pred_check
          %p565 = pneg %p149
        $region58: #{tpu_custom_call.1} parent=39 // pred_check_branch
          %567 = sbr.rel (%p565) target = $region60
        $region59: #{tpu_custom_call.1} parent=39 // pred_region
          %s568 = smul.u32 2, %s21
          %s569 = ssub.s32 3, %s568
          %p570 = scmp.lt.s32.totalorder %s569, 2
          %s571 = scalar_select %p570, %s569, 2
          %s572 = smul.u32 128, %s571
          %p573 = scmp.ne.s32.totalorder 0, %s572
          %s574 = smul.addr %s568, 8
          %s575 = scalar_lea.vmem %s5, %s574
          // Predicated region
          $region61: #{tpu_custom_call.1} parent=59 // pred_check
            %p576 = pneg %p573
          $region62: #{tpu_custom_call.1} parent=59 // pred_check_branch
            %578 = sbr.rel (%p576) target = $region64
          $region63: #{tpu_custom_call.1} parent=59 // pred_region
            // Predicated region
            $region65: #{tpu_custom_call.1} parent=63 // pred_check
              _
            $region66: #{tpu_custom_call.1} parent=63 // pred_check_branch
              %580 = sbr.rel (0) target = $region68
            $region67: #{tpu_custom_call.1} parent=63 // pred_region
              // Predicated region
              $region87: #{tpu_custom_call.1} parent=67 // pred_check
                _
              $region88: #{tpu_custom_call.1} parent=67 // pred_check_branch
                %632 = sbr.rel (0) target = $region90
              $region89: #{tpu_custom_call.1} parent=67 // pred_region
                %s633 = sshrl.u32 %s571, 1
                // While loop
                $region91: #{tpu_custom_call.1} parent=89 // loop_pre_header
                  _
                $region92: #{tpu_custom_call.1} parent=89 // loop_header
                  %s635 = sphi 0, %s637
                  %p636 = scmp.ge.s32.totalorder %s635, %s633
                  %s640 = sphi 0, %s649
                  %s641 = sphi %s564, %s652
                  %s642 = sphi %s575, %s653
                $region93: #{tpu_custom_call.1} parent=89 // loop_header_branch
                  %639 = sbr.rel (%p636) target = $region97
                $region94: #{tpu_custom_call.1} parent=89 // loop_body
                  %v643 = vld [vmem:[%s641] sm:$0xff]
                  %644 = vst [vmem:[%s642] sm:$0xff] %v643
                  %v645 = vld [vmem:[%s641 + $0x8] sm:$0xff]
                  %646 = vst [vmem:[%s642 + $0x8] sm:$0xff] %v645
                  %s647 = sadd.s32 1, %s640
                  %p648 = scmp.ge.s32.totalorder %s647, %s633
                  %s649 = scalar_select %p648, 0, %s647
                  %s650 = smul.u32 %s649, 16
                  %s651 = smul.u32 %s649, 16
                  %s652 = scalar_lea.vmem %s564, %s650 [#allocation9]
                  %s653 = scalar_lea.vmem %s575, %s651
                $region95: #{tpu_custom_call.1} parent=89 // loop_footer
                  %s637 = sadd.s32 %s635, 1
                $region96: #{tpu_custom_call.1} parent=89 // loop_footer_branch
                  %634 = sbr.rel target = $region92
                $region97: #{tpu_custom_call.1} parent=89 // loop_exit
                  _
                %s654 = sshrl.u32 %s571, 1
                %s655 = sand.u32 %s571, 1
                %s656 = smul.u32 %s654, 2
                %s657 = smul.u32 8, %s656
                %s658 = scalar_lea.vmem %s564, %s657 [#allocation9]
                %s659 = smul.u32 8, %s656
                %s660 = scalar_lea.vmem %s575, %s659
                // While loop
                $region98: #{tpu_custom_call.1} parent=89 // loop_pre_header
                  _
                $region99: #{tpu_custom_call.1} parent=89 // loop_header
                  %s662 = sphi 0, %s664
                  %p663 = scmp.ge.s32.totalorder %s662, %s655
                  %s667 = sphi 0, %s674
                  %s668 = sphi %s658, %s677
                  %s669 = sphi %s660, %s678
                $region100: #{tpu_custom_call.1} parent=89 // loop_header_branch
                  %666 = sbr.rel (%p663) target = $region104
                $region101: #{tpu_custom_call.1} parent=89 // loop_body
                  %v670 = vld [vmem:[%s668] sm:$0xff]
                  %671 = vst [vmem:[%s669] sm:$0xff] %v670
                  %s672 = sadd.s32 1, %s667
                  %p673 = scmp.ge.s32.totalorder %s672, %s655
                  %s674 = scalar_select %p673, 0, %s672
                  %s675 = smul.u32 %s674, 8
                  %s676 = smul.u32 %s674, 8
                  %s677 = scalar_lea.vmem %s658, %s675 [#allocation9]
                  %s678 = scalar_lea.vmem %s660, %s676
                $region102: #{tpu_custom_call.1} parent=89 // loop_footer
                  %s664 = sadd.s32 %s662, 1
                $region103: #{tpu_custom_call.1} parent=89 // loop_footer_branch
                  %661 = sbr.rel target = $region99
                $region104: #{tpu_custom_call.1} parent=89 // loop_exit
                  _
              $region90: #{tpu_custom_call.1} parent=67 // pred_fallthru
                _
              // Predicated region
              $region105: #{tpu_custom_call.1} parent=67 // pred_check
                _
              $region106: #{tpu_custom_call.1} parent=67 // pred_check_branch
                %680 = sbr.rel target = $region108
              $region107: #{tpu_custom_call.1} parent=67 // pred_region
                _
              $region108: #{tpu_custom_call.1} parent=67 // pred_fallthru
                _
            $region68: #{tpu_custom_call.1} parent=63 // pred_fallthru
              _
            // Predicated region
            $region69: #{tpu_custom_call.1} parent=63 // pred_check
              _
            $region70: #{tpu_custom_call.1} parent=63 // pred_check_branch
              %582 = sbr.rel target = $region72
            $region71: #{tpu_custom_call.1} parent=63 // pred_region
              %s584 = ssub.s32 256, 1
              %s585 = sshrl.u32 %s571, 1
              // While loop
              $region73: #{tpu_custom_call.1} parent=71 // loop_pre_header
                _
              $region74: #{tpu_custom_call.1} parent=71 // loop_header
                %s587 = sphi 0, %s589
                %p588 = scmp.ge.s32.totalorder %s587, %s585
                %s592 = sphi 0, %s601
                %s593 = sphi %s564, %s604
                %s594 = sphi %s575, %s605
              $region75: #{tpu_custom_call.1} parent=71 // loop_header_branch
                %591 = sbr.rel (%p588) target = $region79
              $region76: #{tpu_custom_call.1} parent=71 // loop_body
                %v595 = vld [vmem:[%s593] sm:%s584]
                %596 = vst [vmem:[%s594] sm:%s584] %v595
                %v597 = vld [vmem:[%s593 + $0x8] sm:%s584]
                %598 = vst [vmem:[%s594 + $0x8] sm:%s584] %v597
                %s599 = sadd.s32 1, %s592
                %p600 = scmp.ge.s32.totalorder %s599, %s585
                %s601 = scalar_select %p600, 0, %s599
                %s602 = smul.u32 %s601, 16
                %s603 = smul.u32 %s601, 16
                %s604 = scalar_lea.vmem %s564, %s602 [#allocation9]
                %s605 = scalar_lea.vmem %s575, %s603
              $region77: #{tpu_custom_call.1} parent=71 // loop_footer
                %s589 = sadd.s32 %s587, 1
              $region78: #{tpu_custom_call.1} parent=71 // loop_footer_branch
                %586 = sbr.rel target = $region74
              $region79: #{tpu_custom_call.1} parent=71 // loop_exit
                _
              %s606 = sshrl.u32 %s571, 1
              %s607 = sand.u32 %s571, 1
              %s608 = smul.u32 %s606, 2
              %s609 = smul.u32 8, %s608
              %s610 = scalar_lea.vmem %s564, %s609 [#allocation9]
              %s611 = smul.u32 8, %s608
              %s612 = scalar_lea.vmem %s575, %s611
              // While loop
              $region80: #{tpu_custom_call.1} parent=71 // loop_pre_header
                _
              $region81: #{tpu_custom_call.1} parent=71 // loop_header
                %s614 = sphi 0, %s616
                %p615 = scmp.ge.s32.totalorder %s614, %s607
                %s619 = sphi 0, %s626
                %s620 = sphi %s610, %s629
                %s621 = sphi %s612, %s630
              $region82: #{tpu_custom_call.1} parent=71 // loop_header_branch
                %618 = sbr.rel (%p615) target = $region86
              $region83: #{tpu_custom_call.1} parent=71 // loop_body
                %v622 = vld [vmem:[%s620] sm:%s584]
                %623 = vst [vmem:[%s621] sm:%s584] %v622
                %s624 = sadd.s32 1, %s619
                %p625 = scmp.ge.s32.totalorder %s624, %s607
                %s626 = scalar_select %p625, 0, %s624
                %s627 = smul.u32 %s626, 8
                %s628 = smul.u32 %s626, 8
                %s629 = scalar_lea.vmem %s610, %s627 [#allocation9]
                %s630 = scalar_lea.vmem %s612, %s628
              $region84: #{tpu_custom_call.1} parent=71 // loop_footer
                %s616 = sadd.s32 %s614, 1
              $region85: #{tpu_custom_call.1} parent=71 // loop_footer_branch
                %613 = sbr.rel target = $region81
              $region86: #{tpu_custom_call.1} parent=71 // loop_exit
                _
            $region72: #{tpu_custom_call.1} parent=63 // pred_fallthru
              _
          $region64: #{tpu_custom_call.1} parent=59 // pred_fallthru
            _
          %681 = vnop
        $region60: #{tpu_custom_call.1} parent=39 // pred_fallthru
          _
      $region40: #{tpu_custom_call.1} parent=5 // pred_fallthru
        _
      %p682 = scmp.le.s32.totalorder 2, %s16
      // Predicated region
      $region109: #{tpu_custom_call.1} parent=5 // pred_check
        %p683 = pneg %p682
      $region110: #{tpu_custom_call.1} parent=5 // pred_check_branch
        %685 = sbr.rel (%p683) target = $region112
      $region111: #{tpu_custom_call.1} parent=5 // pred_region
        %s686 = ssub.s32 %s16, 2
        // Predicated region
        $region113: #{tpu_custom_call.1} parent=111 // pred_check
          %p687 = pneg %p155
        $region114: #{tpu_custom_call.1} parent=111 // pred_check_branch
          %689 = sbr.rel (%p687) target = $region116
        $region115: #{tpu_custom_call.1} parent=111 // pred_region
          %s690 = sand.u32 %s140, 1
          %s691 = sand.u32 %s140, 1
          %s692 = smul.addr %s691, 16
          %s693 = scalar_lea.vmem [#allocation9], %s692
        $region116: #{tpu_custom_call.1} parent=111 // pred_fallthru
          _
      $region112: #{tpu_custom_call.1} parent=5 // pred_fallthru
        _
    $region6: #{tpu_custom_call.1} parent=1 // loop_footer
      %s20 = sadd.s32 1, %s16
    $region7: #{tpu_custom_call.1} parent=1 // loop_footer_branch
      %15 = sbr.rel target = $region3
    $region8: #{tpu_custom_call.1} parent=1 // loop_exit
      _
    %694 = vsyncpa [#allocation3], 1
    %s695 = scalar_lea.sflag [#allocation3], 1
    %696 = vsyncpa %s695, 1
    %697 = vsyncpa [#allocation6], 1
    %698 = vsyncpa [#allocation4], 1
    %s699 = scalar_lea.sflag [#allocation4], 1
    %700 = vsyncpa %s699, 1

</llo_original>
